<compile_context>
chip_gen: v7x
topology: tpu7x:2x2x1
jax: 0.10.0
libtpu: 0.0.40
codegen_flags: <defaults>
</compile_context>

<pallas_src>
import jax
import jax.numpy as jnp
from jax.experimental import pallas as pl
from jax.experimental.pallas import tpu as pltpu

EPS = 1e-6


def sum_fusion_kernel(x_ref, y_ref, wx_ref, wy_ref, bias_ref, o_ref):
    bias = bias_ref[...].astype(jnp.float32)          # (1, D), LN-beta + linear biases folded in

    def ln_bf16(v):
        # One-pass stats: mean and mean-of-squares (single VPU pass, one XLU
        # reduce pair).  Affine (gamma/beta) already folded into the weights.
        v = v.astype(jnp.float32)
        mean = jnp.mean(v, axis=-1, keepdims=True)
        mean_sq = jnp.mean(v * v, axis=-1, keepdims=True)
        var = mean_sq - mean * mean
        return ((v - mean) * jax.lax.rsqrt(var + EPS)).astype(jnp.bfloat16)

    xn = ln_bf16(x_ref[...])                           # (TM, D) bf16
    yn = ln_bf16(y_ref[...])                           # (TM, D) bf16

    # Two MXU matmuls, shared f32 accumulator (no concat copy).
    acc = jnp.dot(xn, wx_ref[...], preferred_element_type=jnp.float32)
    acc = acc + jnp.dot(yn, wy_ref[...], preferred_element_type=jnp.float32)

    o_ref[...] = (acc + bias).astype(o_ref.dtype)


def sum_fusion(x, y, wx_t, bx, wy_t, by, gamma, beta, *, tm=128):
    """x, y: (B, D).  wx_t/wy_t: (D, D) already transposed (in, out).
    bx/by/gamma/beta: (1, D)."""
    B, D = x.shape

    # Batch tile: multiple of 8 sublanes; single-tile fallback keeps the kernel
    # correct for any B (block == full array dims is always legal).
    if B % tm != 0:
        tm = B
    grid = (B // tm,)

    gamma = gamma.reshape(1, D).astype(jnp.float32)
    beta = beta.reshape(1, D).astype(jnp.float32)

    # Fold the LN affine into the linear layers (affine is linear, exact up to
    # float ordering).  Weights scaled per input-row by gamma, then cast to
    # bf16 (MXU-native); beta is pushed through both weight matrices and summed
    # with the linear biases into ONE f32 (1, D) bias vector.
    wx_f = (gamma.T * wx_t).astype(jnp.bfloat16)                  # (D, D)
    wy_f = (gamma.T * wy_t).astype(jnp.bfloat16)                  # (D, D)
    bias = (beta @ wx_t + beta @ wy_t + bx + by).astype(jnp.float32)  # (1, D)

    row_spec = pl.BlockSpec((tm, D), lambda i: (i, 0))            # tiled over batch
    resident = lambda shape: pl.BlockSpec(shape, lambda i: (0, 0))  # VMEM-resident

    return pl.pallas_call(
        sum_fusion_kernel,
        out_shape=jax.ShapeDtypeStruct((B, D), x.dtype),
        grid=grid,
        in_specs=[
            row_spec,             # x
            row_spec,             # y
            resident((D, D)),     # gamma-folded Wx^T (bf16)
            resident((D, D)),     # gamma-folded Wy^T (bf16)
            resident((1, D)),     # fused bias (f32)
        ],
        out_specs=row_spec,
        compiler_params=pltpu.CompilerParams(
            dimension_semantics=("parallel",)),   # shard batch tiles across TCs (v7x)
    )(x, y, wx_f, wy_f, bias)


def reference(x, y, wx_t, bx, wy_t, by, gamma, beta):
    def ln(v):
        m = jnp.mean(v, -1, keepdims=True)
        var = jnp.mean((v - m) ** 2, -1, keepdims=True)
        return (v - m) * jax.lax.rsqrt(var + EPS) * gamma + beta
    return ln(x) @ wx_t + bx + ln(y) @ wy_t + by


if __name__ == "__main__":
    # Lane-dense D (multiple of 128) and a couple of batch tiles so the grid /
    # double-buffered pipeline actually exercises.
    B, D = 256, 128  # batch, embedding_dim

    key = jax.random.PRNGKey(0)
    kx, ky, kwx, kwy = jax.random.split(key, 4)

    x = jax.random.normal(kx, (B, D), dtype=jnp.float32)
    y = jax.random.normal(ky, (B, D), dtype=jnp.float32)

    # nn.Linear(D, D) with xavier_normal_ weights and zero bias (per _init_weights).
    xavier_std = (2.0 / (D + D)) ** 0.5
    wx = jax.random.normal(kwx, (D, D), dtype=jnp.float32) * xavier_std  # torch (out, in)
    wy = jax.random.normal(kwy, (D, D), dtype=jnp.float32) * xavier_std
    wx_t = wx.T  # (in, out) so that  xn @ W^T
    wy_t = wy.T
    bx = jnp.zeros((1, D), dtype=jnp.float32)
    by = jnp.zeros((1, D), dtype=jnp.float32)

    # nn.LayerNorm(D, eps=1e-6) default affine params (untouched by _init_weights).
    gamma = jnp.ones((1, D), dtype=jnp.float32)
    beta = jnp.zeros((1, D), dtype=jnp.float32)

    out = sum_fusion(x, y, wx_t, bx, wy_t, by, gamma, beta)
    out = jax.block_until_ready(out)

    ref = reference(x, y, wx_t, bx, wy_t, by, gamma, beta)
    # bf16 MXU operands with f32 accumulation -> allow bf16-level tolerance.
    assert out.shape == ref.shape
    assert jnp.allclose(out, ref, atol=5e-2, rtol=5e-2), (
        "mismatch vs reference, max abs diff = %e" % float(jnp.max(jnp.abs(out - ref))))

    print("KERNEL_OK")
</pallas_src>

<mosaic_0001>
module attributes {stable_mosaic.version = 11 : i64} {
  func.func @sum_fusion_kernel(%arg0: i32, %arg1: memref<128x128xf32, #tpu.memory_space<vmem>>, %arg2: memref<128x128xf32, #tpu.memory_space<vmem>>, %arg3: memref<128x128xbf16, #tpu.memory_space<vmem>>, %arg4: memref<128x128xbf16, #tpu.memory_space<vmem>>, %arg5: memref<1x128xf32, #tpu.memory_space<vmem>>, %arg6: memref<128x128xf32, #tpu.memory_space<vmem>>) attributes {dimension_semantics = [#tpu.dimension_semantics<parallel>], iteration_bounds = array<i64: 2>, scalar_prefetch = 0 : i64, scratch_operands = 0 : i64, tpu.core_type = #tpu.core_type<tc>, window_params = [{transform_indices = @transform_0, window_bounds = array<i64: 128, 128>}, {transform_indices = @transform_1, window_bounds = array<i64: 128, 128>}, {pipeline_mode = #tpu.pipeline_mode<synchronous>, transform_indices = @transform_2, window_bounds = array<i64: 128, 128>}, {pipeline_mode = #tpu.pipeline_mode<synchronous>, transform_indices = @transform_3, window_bounds = array<i64: 128, 128>}, {pipeline_mode = #tpu.pipeline_mode<synchronous>, transform_indices = @transform_4, window_bounds = array<i64: 1, 128>}, {transform_indices = @transform_5, window_bounds = array<i64: 128, 128>}]} {
    %c0 = arith.constant 0 : index
    %c0_0 = arith.constant 0 : index
    %0 = vector.load %arg5[%c0, %c0_0] : memref<1x128xf32, #tpu.memory_space<vmem>>, vector<1x128xf32>
    %c0_1 = arith.constant 0 : index
    %c0_2 = arith.constant 0 : index
    %1 = vector.load %arg1[%c0_1, %c0_2] : memref<128x128xf32, #tpu.memory_space<vmem>>, vector<128x128xf32>
    %cst = arith.constant dense<0.000000e+00> : vector<128xf32>
    %2 = vector.multi_reduction <add>, %1, %cst [1] : vector<128x128xf32> to vector<128xf32>
    %3 = vector.shape_cast %2 : vector<128xf32> to vector<128x1xf32>
    %cst_3 = arith.constant 1.280000e+02 : f32
    %4 = vector.broadcast %cst_3 : f32 to vector<128x1xf32>
    %5 = arith.divf %3, %4 : vector<128x1xf32>
    %6 = arith.mulf %1, %1 : vector<128x128xf32>
    %cst_4 = arith.constant dense<0.000000e+00> : vector<128xf32>
    %7 = vector.multi_reduction <add>, %6, %cst_4 [1] : vector<128x128xf32> to vector<128xf32>
    %8 = vector.shape_cast %7 : vector<128xf32> to vector<128x1xf32>
    %cst_5 = arith.constant 1.280000e+02 : f32
    %9 = vector.broadcast %cst_5 : f32 to vector<128x1xf32>
    %10 = arith.divf %8, %9 : vector<128x1xf32>
    %11 = arith.mulf %5, %5 : vector<128x1xf32>
    %12 = arith.subf %10, %11 : vector<128x1xf32>
    %13 = vector.broadcast %5 : vector<128x1xf32> to vector<128x128xf32>
    %14 = arith.subf %1, %13 : vector<128x128xf32>
    %cst_6 = arith.constant 9.99999997E-7 : f32
    %15 = vector.broadcast %cst_6 : f32 to vector<128x1xf32>
    %16 = arith.addf %12, %15 : vector<128x1xf32>
    %17 = math.rsqrt %16 : vector<128x1xf32>
    %18 = vector.broadcast %17 : vector<128x1xf32> to vector<128x128xf32>
    %19 = arith.mulf %14, %18 : vector<128x128xf32>
    %20 = arith.truncf %19 : vector<128x128xf32> to vector<128x128xbf16>
    %c0_7 = arith.constant 0 : index
    %c0_8 = arith.constant 0 : index
    %21 = vector.load %arg2[%c0_7, %c0_8] : memref<128x128xf32, #tpu.memory_space<vmem>>, vector<128x128xf32>
    %cst_9 = arith.constant dense<0.000000e+00> : vector<128xf32>
    %22 = vector.multi_reduction <add>, %21, %cst_9 [1] : vector<128x128xf32> to vector<128xf32>
    %23 = vector.shape_cast %22 : vector<128xf32> to vector<128x1xf32>
    %cst_10 = arith.constant 1.280000e+02 : f32
    %24 = vector.broadcast %cst_10 : f32 to vector<128x1xf32>
    %25 = arith.divf %23, %24 : vector<128x1xf32>
    %26 = arith.mulf %21, %21 : vector<128x128xf32>
    %cst_11 = arith.constant dense<0.000000e+00> : vector<128xf32>
    %27 = vector.multi_reduction <add>, %26, %cst_11 [1] : vector<128x128xf32> to vector<128xf32>
    %28 = vector.shape_cast %27 : vector<128xf32> to vector<128x1xf32>
    %cst_12 = arith.constant 1.280000e+02 : f32
    %29 = vector.broadcast %cst_12 : f32 to vector<128x1xf32>
    %30 = arith.divf %28, %29 : vector<128x1xf32>
    %31 = arith.mulf %25, %25 : vector<128x1xf32>
    %32 = arith.subf %30, %31 : vector<128x1xf32>
    %33 = vector.broadcast %25 : vector<128x1xf32> to vector<128x128xf32>
    %34 = arith.subf %21, %33 : vector<128x128xf32>
    %cst_13 = arith.constant 9.99999997E-7 : f32
    %35 = vector.broadcast %cst_13 : f32 to vector<128x1xf32>
    %36 = arith.addf %32, %35 : vector<128x1xf32>
    %37 = math.rsqrt %36 : vector<128x1xf32>
    %38 = vector.broadcast %37 : vector<128x1xf32> to vector<128x128xf32>
    %39 = arith.mulf %34, %38 : vector<128x128xf32>
    %40 = arith.truncf %39 : vector<128x128xf32> to vector<128x128xbf16>
    %c0_14 = arith.constant 0 : index
    %c0_15 = arith.constant 0 : index
    %41 = vector.load %arg3[%c0_14, %c0_15] : memref<128x128xbf16, #tpu.memory_space<vmem>>, vector<128x128xbf16>
    %cst_16 = arith.constant dense<0.000000e+00> : vector<128x128xf32>
    %42 = tpu.matmul %20, %41, %cst_16 {dimension_numbers = #tpu.dot_dimension_numbers<[1], [0], [0], [1], [0, 0, 1, 1], [], []>} : vector<128x128xbf16>, vector<128x128xbf16>, vector<128x128xf32> -> vector<128x128xf32>
    %c0_17 = arith.constant 0 : index
    %c0_18 = arith.constant 0 : index
    %43 = vector.load %arg4[%c0_17, %c0_18] : memref<128x128xbf16, #tpu.memory_space<vmem>>, vector<128x128xbf16>
    %cst_19 = arith.constant dense<0.000000e+00> : vector<128x128xf32>
    %44 = tpu.matmul %40, %43, %cst_19 {dimension_numbers = #tpu.dot_dimension_numbers<[1], [0], [0], [1], [0, 0, 1, 1], [], []>} : vector<128x128xbf16>, vector<128x128xbf16>, vector<128x128xf32> -> vector<128x128xf32>
    %45 = arith.addf %42, %44 : vector<128x128xf32>
    %46 = vector.broadcast %0 : vector<1x128xf32> to vector<128x128xf32>
    %47 = arith.addf %45, %46 : vector<128x128xf32>
    %c0_20 = arith.constant 0 : index
    %c0_21 = arith.constant 0 : index
    %48 = vector.load %arg6[%c0_20, %c0_21] : memref<128x128xf32, #tpu.memory_space<vmem>>, vector<128x128xf32>
    tpu.vector_store %arg6[%c0_20, %c0_21], %47 {strides = array<i32>} : memref<128x128xf32, #tpu.memory_space<vmem>>, vector<128x128xf32>,
    return
  }
  func.func @transform_0(%arg0: i32) -> (i32, i32) {
    %c0_i32 = arith.constant 0 : i32
    %c0_i32_0 = arith.constant 0 : i32
    return %arg0, %c0_i32 : i32, i32
  }
  func.func @transform_1(%arg0: i32) -> (i32, i32) {
    %c0_i32 = arith.constant 0 : i32
    %c0_i32_0 = arith.constant 0 : i32
    return %arg0, %c0_i32 : i32, i32
  }
  func.func @transform_2(%arg0: i32) -> (i32, i32) {
    %c0_i32 = arith.constant 0 : i32
    %c0_i32_0 = arith.constant 0 : i32
    %c0_i32_1 = arith.constant 0 : i32
    return %c0_i32, %c0_i32_0 : i32, i32
  }
  func.func @transform_3(%arg0: i32) -> (i32, i32) {
    %c0_i32 = arith.constant 0 : i32
    %c0_i32_0 = arith.constant 0 : i32
    %c0_i32_1 = arith.constant 0 : i32
    return %c0_i32, %c0_i32_0 : i32, i32
  }
  func.func @transform_4(%arg0: i32) -> (i32, i32) {
    %c0_i32 = arith.constant 0 : i32
    %c0_i32_0 = arith.constant 0 : i32
    %c0_i32_1 = arith.constant 0 : i32
    return %c0_i32, %c0_i32_0 : i32, i32
  }
  func.func @transform_5(%arg0: i32) -> (i32, i32) {
    %c0_i32 = arith.constant 0 : i32
    %c0_i32_0 = arith.constant 0 : i32
    return %arg0, %c0_i32 : i32, i32
  }
}

</mosaic_0001>

<llo_original>
// kernel: tpu_custom_call.1
$region0: #{tpu_custom_call.1}
  #allocation0 [shape = 'u32[]', space=smem, size = 0x4, offset = 0x4, fixed_abs, tag = 'smem constant byte address 0x4 - core index']
  #allocation1 [shape = 'u32[144,128]{1,0:T(1,128)}', space=vmem, size = 0x12000, scoped, tag = 'internal scratch']
  %s0 = inlined_call_operand.hbm [shape: f32[256,128], index: 0, kind: input, shape index: {}]
  %s1 = inlined_call_operand.hbm [shape: f32[256,128], index: 1, kind: input, shape index: {}]
  %s2 = inlined_call_operand.hbm [shape: bf16[128,128], index: 2, kind: input, shape index: {}]
  %s3 = inlined_call_operand.hbm [shape: bf16[128,128], index: 3, kind: input, shape index: {}]
  %s4 = inlined_call_operand.vmem [shape: f32[1,128], index: 4, kind: input, shape index: {}]
  %s5 = inlined_call_operand.hbm [shape: f32[256,128], index: 5, kind: output, shape index: {}]
  %s6 = sld [smem:[#allocation0]]
  $region69: #{tpu_custom_call.1} parent=0
    _
  %s8 = ssub.s32 1, %s6
  %s9 = scalar_select 0, %s8, %s6
  $region1: #{tpu_custom_call.1} parent=0
    #allocation2 [shape = 'u8[131072]{0}', space=vmem, size = 0x20000, scoped, tag = 'input window, operand 0']
    #allocation3 [shape = 's32[2]{0}', space=sflag, size = 0x8, scoped, tag = 'scoped memory for tpu_custom_call.1']
    #allocation4 [shape = 's32[2]{0}', space=sflag, size = 0x8, scoped, tag = 'scoped memory for tpu_custom_call.1']
    #allocation5 [shape = 'u8[131072]{0}', space=vmem, size = 0x20000, scoped, tag = 'input window, operand 1']
    #allocation6 [shape = 's32[2]{0}', space=sflag, size = 0x8, scoped, tag = 'scoped memory for tpu_custom_call.1']
    #allocation7 [shape = 'u8[32768]{0}', space=vmem, size = 0x8000, scoped, tag = 'input window, operand 2, single buffered']
    #allocation8 [shape = 'u8[32768]{0}', space=vmem, size = 0x8000, scoped, tag = 'input window, operand 3, single buffered']
    #allocation9 [shape = 's32[1]{0}', space=sflag, size = 0x4, scoped, tag = 'scoped memory for tpu_custom_call.1']
    #allocation10 [shape = 'u8[131072]{0}', space=vmem, size = 0x20000, scoped, tag = 'output window, operand 0']
    %10 = vsyncpa [#allocation3], 0
    %s11 = scalar_lea.sflag [#allocation3], 1
    %12 = vsyncpa %s11, 0
    %13 = vsyncpa [#allocation6], 0
    %s14 = scalar_lea.sflag [#allocation6], 1
    %15 = vsyncpa %s14, 0
    %16 = vsyncpa [#allocation9], 0
    %17 = vsyncpa [#allocation4], 0
    %s18 = scalar_lea.sflag [#allocation4], 1
    %19 = vsyncpa %s18, 0
    loop: start=0, step=1, limit=4
    $region2: #{tpu_custom_call.1} parent=1 // loop_pre_header
      _
    $region3: #{tpu_custom_call.1} parent=1 // loop_header
      %s21 = sphi 0, %s25
      %p22 = scmp.ge.s32.totalorder %s21, 4
      %s31 = sphi 0, %s33
      %s34 = sphi 0, %s31
      %s35 = sphi 0, %s34
      %s51 = sphi 0, %s35
      %s57 = sphi 0, %s59
      %s60 = sphi 0, %s57
      %s61 = sphi 0, %s60
      %s77 = sphi 0, %s61
      %s81 = sphi 0, %s81
      %s83 = sphi 0, %s81
      %s84 = sphi 0, %s83
      %s98 = sphi 0, %s84
      %s102 = sphi 0, %s102
      %s104 = sphi 0, %s102
      %s105 = sphi 0, %s104
      %s119 = sphi 0, %s105
      %s123 = sphi 0, %s123
      %s125 = sphi 0, %s123
      %s126 = sphi 0, %s125
      %s140 = sphi 0, %s126
      %s146 = sphi 0, %s148
      %s149 = sphi 0, %s146
      %s150 = sphi 0, %s149
      %s166 = sphi 0, %s150
    $region4: #{tpu_custom_call.1} parent=1 // loop_header_branch
      %24 = sbr.rel (%p22) target = $region8
    $region5: #{tpu_custom_call.1} parent=1 // loop_body
      %s26 = ssub.s32 %s21, 1
      %s27 = ssub.s32 %s21, 2
      %s28 = sadd.s32 %s21, 1
      %s29 = ssub.s32 %s21, %s28
      %p30 = scmp.eq.s32.totalorder %s29, 0
      %s32 = sadd.s32 %s31, 1
      %s33 = scalar_select %p30, %s31, %s32
      %p36 = pneg %p30
      %p37 = scmp.eq.s32.totalorder %s21, 1
      %p38 = por %p36, %p37
      %p39 = scmp.ne.s32.totalorder %s31, %s34
      %p40 = scmp.eq.s32.totalorder %s21, 0
      %p41 = por %p39, %p40
      %p42 = scmp.ne.s32.totalorder %s31, %s34
      %p43 = scmp.eq.s32.totalorder %s26, 1
      %p44 = por %p42, %p43
      %p45 = scmp.ne.s32.totalorder %s34, %s35
      %p46 = scmp.eq.s32.totalorder %s26, 0
      %p47 = por %p45, %p46
      %p48 = scmp.ne.s32.totalorder %s34, %s35
      %p49 = scmp.eq.s32.totalorder %s27, 1
      %p50 = por %p48, %p49
      %p52 = scmp.ne.s32.totalorder %s35, %s51
      %p53 = scmp.eq.s32.totalorder %s27, 0
      %p54 = por %p52, %p53
      %s55 = ssub.s32 %s21, %s28
      %p56 = scmp.eq.s32.totalorder %s55, 0
      %s58 = sadd.s32 %s57, 1
      %s59 = scalar_select %p56, %s57, %s58
      %p62 = pneg %p56
      %p63 = scmp.eq.s32.totalorder %s21, 1
      %p64 = por %p62, %p63
      %p65 = scmp.ne.s32.totalorder %s57, %s60
      %p66 = scmp.eq.s32.totalorder %s21, 0
      %p67 = por %p65, %p66
      %p68 = scmp.ne.s32.totalorder %s57, %s60
      %p69 = scmp.eq.s32.totalorder %s26, 1
      %p70 = por %p68, %p69
      %p71 = scmp.ne.s32.totalorder %s60, %s61
      %p72 = scmp.eq.s32.totalorder %s26, 0
      %p73 = por %p71, %p72
      %p74 = scmp.ne.s32.totalorder %s60, %s61
      %p75 = scmp.eq.s32.totalorder %s27, 1
      %p76 = por %p74, %p75
      %p78 = scmp.ne.s32.totalorder %s61, %s77
      %p79 = scmp.eq.s32.totalorder %s27, 0
      %p80 = por %p78, %p79
      %s82 = sadd.s32 %s81, 1
      %p85 = scmp.eq.s32.totalorder %s21, 1
      %p86 = scmp.ne.s32.totalorder %s81, %s83
      %p87 = scmp.eq.s32.totalorder %s21, 0
      %p88 = por %p86, %p87
      %p89 = scmp.ne.s32.totalorder %s81, %s83
      %p90 = scmp.eq.s32.totalorder %s26, 1
      %p91 = por %p89, %p90
      %p92 = scmp.ne.s32.totalorder %s83, %s84
      %p93 = scmp.eq.s32.totalorder %s26, 0
      %p94 = por %p92, %p93
      %p95 = scmp.ne.s32.totalorder %s83, %s84
      %p96 = scmp.eq.s32.totalorder %s27, 1
      %p97 = por %p95, %p96
      %p99 = scmp.ne.s32.totalorder %s84, %s98
      %p100 = scmp.eq.s32.totalorder %s27, 0
      %p101 = por %p99, %p100
      %s103 = sadd.s32 %s102, 1
      %p106 = scmp.eq.s32.totalorder %s21, 1
      %p107 = scmp.ne.s32.totalorder %s102, %s104
      %p108 = scmp.eq.s32.totalorder %s21, 0
      %p109 = por %p107, %p108
      %p110 = scmp.ne.s32.totalorder %s102, %s104
      %p111 = scmp.eq.s32.totalorder %s26, 1
      %p112 = por %p110, %p111
      %p113 = scmp.ne.s32.totalorder %s104, %s105
      %p114 = scmp.eq.s32.totalorder %s26, 0
      %p115 = por %p113, %p114
      %p116 = scmp.ne.s32.totalorder %s104, %s105
      %p117 = scmp.eq.s32.totalorder %s27, 1
      %p118 = por %p116, %p117
      %p120 = scmp.ne.s32.totalorder %s105, %s119
      %p121 = scmp.eq.s32.totalorder %s27, 0
      %p122 = por %p120, %p121
      %s124 = sadd.s32 %s123, 1
      %p127 = scmp.eq.s32.totalorder %s21, 1
      %p128 = scmp.ne.s32.totalorder %s123, %s125
      %p129 = scmp.eq.s32.totalorder %s21, 0
      %p130 = por %p128, %p129
      %p131 = scmp.ne.s32.totalorder %s123, %s125
      %p132 = scmp.eq.s32.totalorder %s26, 1
      %p133 = por %p131, %p132
      %p134 = scmp.ne.s32.totalorder %s125, %s126
      %p135 = scmp.eq.s32.totalorder %s26, 0
      %p136 = por %p134, %p135
      %p137 = scmp.ne.s32.totalorder %s125, %s126
      %p138 = scmp.eq.s32.totalorder %s27, 1
      %p139 = por %p137, %p138
      %p141 = scmp.ne.s32.totalorder %s126, %s140
      %p142 = scmp.eq.s32.totalorder %s27, 0
      %p143 = por %p141, %p142
      %s144 = ssub.s32 %s21, %s28
      %p145 = scmp.eq.s32.totalorder %s144, 0
      %s147 = sadd.s32 %s146, 1
      %s148 = scalar_select %p145, %s146, %s147
      %p151 = pneg %p145
      %p152 = scmp.eq.s32.totalorder %s21, 1
      %p153 = por %p151, %p152
      %p154 = scmp.ne.s32.totalorder %s146, %s149
      %p155 = scmp.eq.s32.totalorder %s21, 0
      %p156 = por %p154, %p155
      %p157 = scmp.ne.s32.totalorder %s146, %s149
      %p158 = scmp.eq.s32.totalorder %s26, 1
      %p159 = por %p157, %p158
      %p160 = scmp.ne.s32.totalorder %s149, %s150
      %p161 = scmp.eq.s32.totalorder %s26, 0
      %p162 = por %p160, %p161
      %p163 = scmp.ne.s32.totalorder %s149, %s150
      %p164 = scmp.eq.s32.totalorder %s27, 1
      %p165 = por %p163, %p164
      %p167 = scmp.ne.s32.totalorder %s150, %s166
      %p168 = scmp.eq.s32.totalorder %s27, 0
      %p169 = por %p167, %p168
      %p170 = scmp.le.s32.totalorder 1, %s21
      %p171 = scmp.lt.s32.totalorder %s21, 3
      %p172 = pnand %p170, %p171
      %p173 = pneg %p172
      // Predicated region
      $region9: #{tpu_custom_call.1} parent=5 // pred_check
        _
      $region10: #{tpu_custom_call.1} parent=5 // pred_check_branch
        %175 = sbr.rel (%p172) target = $region12
      $region11: #{tpu_custom_call.1} parent=5 // pred_region
        %s176 = ssub.s32 %s21, 1
        // Predicated region
        $region13: #{tpu_custom_call.1} parent=11 // pred_check
          %p177 = pneg %p94
        $region14: #{tpu_custom_call.1} parent=11 // pred_check_branch
          %179 = sbr.rel (%p177) target = $region16
        $region15: #{tpu_custom_call.1} parent=11 // pred_region
          %s181 = ssub.s32 1024, 1024
          %182 = vsyncadd [#allocation6], %s181
          %s183 = sshll.u32 [#allocation7], 4
          %s184 = int_to_ptr.vmem [resolvable:$true] %s183
          %189 = dma.hbm_to_vmem [thread:$0]  %s2, 1024, %s184, [#allocation6], 64, 64, 4
        $region16: #{tpu_custom_call.1} parent=11 // pred_fallthru
          _
        // Predicated region
        $region17: #{tpu_custom_call.1} parent=11 // pred_check
          %p190 = pneg %p115
        $region18: #{tpu_custom_call.1} parent=11 // pred_check_branch
          %192 = sbr.rel (%p190) target = $region20
        $region19: #{tpu_custom_call.1} parent=11 // pred_region
          %s194 = ssub.s32 1024, 1024
          %195 = vsyncadd [#allocation9], %s194
          %s196 = sshll.u32 [#allocation8], 4
          %s197 = int_to_ptr.vmem [resolvable:$true] %s196
          %202 = dma.hbm_to_vmem [thread:$0]  %s3, 1024, %s197, [#allocation9], 64, 64, 4
        $region20: #{tpu_custom_call.1} parent=11 // pred_fallthru
          _
        // Predicated region
        $region21: #{tpu_custom_call.1} parent=11 // pred_check
          %p203 = pneg %p136
        $region22: #{tpu_custom_call.1} parent=11 // pred_check_branch
          %205 = sbr.rel (%p203) target = $region24
        $region23: #{tpu_custom_call.1} parent=11 // pred_region
          _
        $region24: #{tpu_custom_call.1} parent=11 // pred_fallthru
          _
      $region12: #{tpu_custom_call.1} parent=5 // pred_fallthru
        _
      %p206 = scmp.lt.s32.totalorder %s21, 2
      // Predicated region
      $region25: #{tpu_custom_call.1} parent=5 // pred_check
        %p207 = pneg %p206
      $region26: #{tpu_custom_call.1} parent=5 // pred_check_branch
        %209 = sbr.rel (%p207) target = $region28
      $region27: #{tpu_custom_call.1} parent=5 // pred_region
        // Predicated region
        $region29: #{tpu_custom_call.1} parent=27 // pred_check
          %p210 = pneg %p41
        $region30: #{tpu_custom_call.1} parent=27 // pred_check_branch
          %212 = sbr.rel (%p210) target = $region32
        $region31: #{tpu_custom_call.1} parent=27 // pred_region
          %s213 = sand.u32 %s31, 1
          %s214 = scalar_lea.sflag [#allocation3], %s213
          %s215 = sand.u32 %s31, 1
          %s216 = smul.addr %s215, 128
          %s217 = scalar_lea.vmem [#allocation2], %s216
          %s218 = smul.u32 16, %s21
          %s220 = ssub.s32 2048, 2048
          %221 = vsyncadd %s214, %s220
          %s222 = smul.addr %s218, 128
          %s223 = scalar_lea.hbm %s0, %s222
          %s224 = sshll.u32 %s217, 4
          %s225 = int_to_ptr.vmem [resolvable:$true] %s224
          %230 = dma.hbm_to_vmem [thread:$0]  %s223, 2048, %s225, %s214, 128, 128, 8
        $region32: #{tpu_custom_call.1} parent=27 // pred_fallthru
          _
        // Predicated region
        $region33: #{tpu_custom_call.1} parent=27 // pred_check
          %p231 = pneg %p67
        $region34: #{tpu_custom_call.1} parent=27 // pred_check_branch
          %233 = sbr.rel (%p231) target = $region36
        $region35: #{tpu_custom_call.1} parent=27 // pred_region
          %s234 = sand.u32 %s21, 1
          %s235 = scalar_lea.sflag [#allocation6], %s234
          %s236 = sand.u32 %s57, 1
          %s237 = smul.addr %s236, 128
          %s238 = scalar_lea.vmem [#allocation5], %s237
          %s239 = smul.u32 16, %s21
          %s241 = ssub.s32 2048, 2048
          %242 = vsyncadd %s235, %s241
          %s243 = smul.addr %s239, 128
          %s244 = scalar_lea.hbm %s1, %s243
          %s245 = sshll.u32 %s238, 4
          %s246 = int_to_ptr.vmem [resolvable:$true] %s245
          %251 = dma.hbm_to_vmem [thread:$0]  %s244, 2048, %s246, %s235, 128, 128, 8
        $region36: #{tpu_custom_call.1} parent=27 // pred_fallthru
          _
      $region28: #{tpu_custom_call.1} parent=5 // pred_fallthru
        _
      %p252 = scmp.le.s32.totalorder 1, %s21
      %p253 = scmp.lt.s32.totalorder %s21, 3
      %p254 = pnand %p252, %p253
      %p255 = pneg %p254
      // Predicated region
      $region37: #{tpu_custom_call.1} parent=5 // pred_check
        _
      $region38: #{tpu_custom_call.1} parent=5 // pred_check_branch
        %257 = sbr.rel (%p254) target = $region40
      $region39: #{tpu_custom_call.1} parent=5 // pred_region
        %s258 = ssub.s32 %s21, 1
        %s259 = sand.u32 %s34, 1
        %s260 = scalar_lea.sflag [#allocation3], %s259
        %s261 = sand.u32 %s34, 1
        %s262 = smul.addr %s261, 128
        %s263 = scalar_lea.vmem [#allocation2], %s262
        // Predicated region
        $region41: #{tpu_custom_call.1} parent=39 // pred_check
          %p264 = pneg %p47
        $region42: #{tpu_custom_call.1} parent=39 // pred_check_branch
          %266 = sbr.rel (%p264) target = $region44
        $region43: #{tpu_custom_call.1} parent=39 // pred_region
          %267 = dma.done %s260, 2048
        $region44: #{tpu_custom_call.1} parent=39 // pred_fallthru
          _
        %s268 = sand.u32 %s26, 1
        %s269 = scalar_lea.sflag [#allocation6], %s268
        %s270 = sand.u32 %s60, 1
        %s271 = smul.addr %s270, 128
        %s272 = scalar_lea.vmem [#allocation5], %s271
        // Predicated region
        $region45: #{tpu_custom_call.1} parent=39 // pred_check
          %p273 = pneg %p73
        $region46: #{tpu_custom_call.1} parent=39 // pred_check_branch
          %275 = sbr.rel (%p273) target = $region48
        $region47: #{tpu_custom_call.1} parent=39 // pred_region
          %276 = dma.done %s269, 2048
        $region48: #{tpu_custom_call.1} parent=39 // pred_fallthru
          _
        // Predicated region
        $region49: #{tpu_custom_call.1} parent=39 // pred_check
          %p277 = pneg %p94
        $region50: #{tpu_custom_call.1} parent=39 // pred_check_branch
          %279 = sbr.rel (%p277) target = $region52
        $region51: #{tpu_custom_call.1} parent=39 // pred_region
          %280 = dma.done [#allocation6], 1024
        $region52: #{tpu_custom_call.1} parent=39 // pred_fallthru
          _
        // Predicated region
        $region53: #{tpu_custom_call.1} parent=39 // pred_check
          %p281 = pneg %p115
        $region54: #{tpu_custom_call.1} parent=39 // pred_check_branch
          %283 = sbr.rel (%p281) target = $region56
        $region55: #{tpu_custom_call.1} parent=39 // pred_region
          %284 = dma.done [#allocation9], 1024
        $region56: #{tpu_custom_call.1} parent=39 // pred_fallthru
          _
        %s285 = sand.u32 %s34, 1
        %s286 = scalar_lea.sflag [#allocation3], %s285
        %s287 = sand.u32 %s34, 1
        %s288 = smul.addr %s287, 128
        %s289 = scalar_lea.vmem [#allocation2], %s288
        %p290 = pneg %p47
        %p291 = pneg %p44
        %s292 = sand.u32 %s26, 1
        %s293 = scalar_lea.sflag [#allocation6], %s292
        %s294 = sand.u32 %s60, 1
        %s295 = smul.addr %s294, 128
        %s296 = scalar_lea.vmem [#allocation5], %s295
        %p297 = pneg %p73
        %p298 = pneg %p70
        %p299 = pneg %p94
        %p300 = pneg %p91
        %p301 = pneg %p115
        %p302 = pneg %p112
        %p303 = pneg %p136
        %p304 = pneg %p133
        %p305 = pneg %p162
        %p306 = pneg %p159
        %s307 = sand.u32 %s149, 1
        %s308 = scalar_lea.sflag [#allocation4], %s307
        %s309 = sand.u32 %s149, 1
        %s310 = smul.addr %s309, 128
        %s311 = scalar_lea.vmem [#allocation10], %s310
        %s312 = smul.u32 16, %s26
        %s313 = smul.u32 16, %s26
        %s314 = smul.u32 16, %s26
        %v316 = vld [vmem:[%s4] sm:$0x1]
        %v317 = vld [vmem:[%s263] sm:$0xff]
        %v318 = vld [vmem:[%s263 + $0x8] sm:$0xff]
        %v319 = vld [vmem:[%s263 + $0x10] sm:$0xff]
        %v320 = vld [vmem:[%s263 + $0x18] sm:$0xff]
        %v321 = vld [vmem:[%s263 + $0x20] sm:$0xff]
        %v322 = vld [vmem:[%s263 + $0x28] sm:$0xff]
        %v323 = vld [vmem:[%s263 + $0x30] sm:$0xff]
        %v324 = vld [vmem:[%s263 + $0x38] sm:$0xff]
        %v325 = vld [vmem:[%s263 + $0x40] sm:$0xff]
        %v326 = vld [vmem:[%s263 + $0x48] sm:$0xff]
        %v327 = vld [vmem:[%s263 + $0x50] sm:$0xff]
        %v328 = vld [vmem:[%s263 + $0x58] sm:$0xff]
        %v329 = vld [vmem:[%s263 + $0x60] sm:$0xff]
        %v330 = vld [vmem:[%s263 + $0x68] sm:$0xff]
        %v331 = vld [vmem:[%s263 + $0x70] sm:$0xff]
        %v332 = vld [vmem:[%s263 + $0x78] sm:$0xff]
        %333 = vadd.xlane.f32.xlu0 %v317
        %v334 = vpop.xlane.xlu0 %333
        %335 = vadd.xlane.f32.xlu0 %v318
        %v336 = vpop.xlane.xlu0 %335
        %337 = vadd.xlane.f32.xlu0 %v319
        %v338 = vpop.xlane.xlu0 %337
        %339 = vadd.xlane.f32.xlu0 %v320
        %v340 = vpop.xlane.xlu0 %339
        %341 = vadd.xlane.f32.xlu0 %v321
        %v342 = vpop.xlane.xlu0 %341
        %343 = vadd.xlane.f32.xlu0 %v322
        %v344 = vpop.xlane.xlu0 %343
        %345 = vadd.xlane.f32.xlu0 %v323
        %v346 = vpop.xlane.xlu0 %345
        %347 = vadd.xlane.f32.xlu0 %v324
        %v348 = vpop.xlane.xlu0 %347
        %349 = vadd.xlane.f32.xlu0 %v325
        %v350 = vpop.xlane.xlu0 %349
        %351 = vadd.xlane.f32.xlu0 %v326
        %v352 = vpop.xlane.xlu0 %351
        %353 = vadd.xlane.f32.xlu0 %v327
        %v354 = vpop.xlane.xlu0 %353
        %355 = vadd.xlane.f32.xlu0 %v328
        %v356 = vpop.xlane.xlu0 %355
        %357 = vadd.xlane.f32.xlu0 %v329
        %v358 = vpop.xlane.xlu0 %357
        %359 = vadd.xlane.f32.xlu0 %v330
        %v360 = vpop.xlane.xlu0 %359
        %361 = vadd.xlane.f32.xlu0 %v331
        %v362 = vpop.xlane.xlu0 %361
        %363 = vadd.xlane.f32.xlu0 %v332
        %v364 = vpop.xlane.xlu0 %363
        %v365 = vrcp.pop 128.0
        %v366 = vmul.f32 %v334, %v365
        %v367 = vmul.f32 %v336, %v365
        %v368 = vmul.f32 %v338, %v365
        %v369 = vmul.f32 %v340, %v365
        %v370 = vmul.f32 %v342, %v365
        %v371 = vmul.f32 %v344, %v365
        %v372 = vmul.f32 %v346, %v365
        %v373 = vmul.f32 %v348, %v365
        %v374 = vmul.f32 %v350, %v365
        %v375 = vmul.f32 %v352, %v365
        %v376 = vmul.f32 %v354, %v365
        %v377 = vmul.f32 %v356, %v365
        %v378 = vmul.f32 %v358, %v365
        %v379 = vmul.f32 %v360, %v365
        %v380 = vmul.f32 %v362, %v365
        %v381 = vmul.f32 %v364, %v365
        %v382 = vmul.f32 %v317, %v317
        %v383 = vmul.f32 %v318, %v318
        %v384 = vmul.f32 %v319, %v319
        %v385 = vmul.f32 %v320, %v320
        %v386 = vmul.f32 %v321, %v321
        %v387 = vmul.f32 %v322, %v322
        %v388 = vmul.f32 %v323, %v323
        %v389 = vmul.f32 %v324, %v324
        %v390 = vmul.f32 %v325, %v325
        %v391 = vmul.f32 %v326, %v326
        %v392 = vmul.f32 %v327, %v327
        %v393 = vmul.f32 %v328, %v328
        %v394 = vmul.f32 %v329, %v329
        %v395 = vmul.f32 %v330, %v330
        %v396 = vmul.f32 %v331, %v331
        %v397 = vmul.f32 %v332, %v332
        %398 = vadd.xlane.f32.xlu0 %v382
        %v399 = vpop.xlane.xlu0 %398
        %400 = vadd.xlane.f32.xlu0 %v383
        %v401 = vpop.xlane.xlu0 %400
        %402 = vadd.xlane.f32.xlu0 %v384
        %v403 = vpop.xlane.xlu0 %402
        %404 = vadd.xlane.f32.xlu0 %v385
        %v405 = vpop.xlane.xlu0 %404
        %406 = vadd.xlane.f32.xlu0 %v386
        %v407 = vpop.xlane.xlu0 %406
        %408 = vadd.xlane.f32.xlu0 %v387
        %v409 = vpop.xlane.xlu0 %408
        %410 = vadd.xlane.f32.xlu0 %v388
        %v411 = vpop.xlane.xlu0 %410
        %412 = vadd.xlane.f32.xlu0 %v389
        %v413 = vpop.xlane.xlu0 %412
        %414 = vadd.xlane.f32.xlu0 %v390
        %v415 = vpop.xlane.xlu0 %414
        %416 = vadd.xlane.f32.xlu0 %v391
        %v417 = vpop.xlane.xlu0 %416
        %418 = vadd.xlane.f32.xlu0 %v392
        %v419 = vpop.xlane.xlu0 %418
        %420 = vadd.xlane.f32.xlu0 %v393
        %v421 = vpop.xlane.xlu0 %420
        %422 = vadd.xlane.f32.xlu0 %v394
        %v423 = vpop.xlane.xlu0 %422
        %424 = vadd.xlane.f32.xlu0 %v395
        %v425 = vpop.xlane.xlu0 %424
        %426 = vadd.xlane.f32.xlu0 %v396
        %v427 = vpop.xlane.xlu0 %426
        %428 = vadd.xlane.f32.xlu0 %v397
        %v429 = vpop.xlane.xlu0 %428
        %v430 = vmul.f32 %v399, %v365
        %v431 = vmul.f32 %v401, %v365
        %v432 = vmul.f32 %v403, %v365
        %v433 = vmul.f32 %v405, %v365
        %v434 = vmul.f32 %v407, %v365
        %v435 = vmul.f32 %v409, %v365
        %v436 = vmul.f32 %v411, %v365
        %v437 = vmul.f32 %v413, %v365
        %v438 = vmul.f32 %v415, %v365
        %v439 = vmul.f32 %v417, %v365
        %v440 = vmul.f32 %v419, %v365
        %v441 = vmul.f32 %v421, %v365
        %v442 = vmul.f32 %v423, %v365
        %v443 = vmul.f32 %v425, %v365
        %v444 = vmul.f32 %v427, %v365
        %v445 = vmul.f32 %v429, %v365
        %v446 = vmul.f32 %v366, %v366
        %v447 = vmul.f32 %v367, %v367
        %v448 = vmul.f32 %v368, %v368
        %v449 = vmul.f32 %v369, %v369
        %v450 = vmul.f32 %v370, %v370
        %v451 = vmul.f32 %v371, %v371
        %v452 = vmul.f32 %v372, %v372
        %v453 = vmul.f32 %v373, %v373
        %v454 = vmul.f32 %v374, %v374
        %v455 = vmul.f32 %v375, %v375
        %v456 = vmul.f32 %v376, %v376
        %v457 = vmul.f32 %v377, %v377
        %v458 = vmul.f32 %v378, %v378
        %v459 = vmul.f32 %v379, %v379
        %v460 = vmul.f32 %v380, %v380
        %v461 = vmul.f32 %v381, %v381
        %v462 = vsub.f32 %v430, %v446
        %v463 = vsub.f32 %v431, %v447
        %v464 = vsub.f32 %v432, %v448
        %v465 = vsub.f32 %v433, %v449
        %v466 = vsub.f32 %v434, %v450
        %v467 = vsub.f32 %v435, %v451
        %v468 = vsub.f32 %v436, %v452
        %v469 = vsub.f32 %v437, %v453
        %v470 = vsub.f32 %v438, %v454
        %v471 = vsub.f32 %v439, %v455
        %v472 = vsub.f32 %v440, %v456
        %v473 = vsub.f32 %v441, %v457
        %v474 = vsub.f32 %v442, %v458
        %v475 = vsub.f32 %v443, %v459
        %v476 = vsub.f32 %v444, %v460
        %v477 = vsub.f32 %v445, %v461
        %v478 = vsub.f32 %v317, %v366
        %v479 = vsub.f32 %v318, %v367
        %v480 = vsub.f32 %v319, %v368
        %v481 = vsub.f32 %v320, %v369
        %v482 = vsub.f32 %v321, %v370
        %v483 = vsub.f32 %v322, %v371
        %v484 = vsub.f32 %v323, %v372
        %v485 = vsub.f32 %v324, %v373
        %v486 = vsub.f32 %v325, %v374
        %v487 = vsub.f32 %v326, %v375
        %v488 = vsub.f32 %v327, %v376
        %v489 = vsub.f32 %v328, %v377
        %v490 = vsub.f32 %v329, %v378
        %v491 = vsub.f32 %v330, %v379
        %v492 = vsub.f32 %v331, %v380
        %v493 = vsub.f32 %v332, %v381
        %v494 = vadd.f32 %v462, 1e-06
        %v495 = vadd.f32 %v463, 1e-06
        %v496 = vadd.f32 %v464, 1e-06
        %v497 = vadd.f32 %v465, 1e-06
        %v498 = vadd.f32 %v466, 1e-06
        %v499 = vadd.f32 %v467, 1e-06
        %v500 = vadd.f32 %v468, 1e-06
        %v501 = vadd.f32 %v469, 1e-06
        %v502 = vadd.f32 %v470, 1e-06
        %v503 = vadd.f32 %v471, 1e-06
        %v504 = vadd.f32 %v472, 1e-06
        %v505 = vadd.f32 %v473, 1e-06
        %v506 = vadd.f32 %v474, 1e-06
        %v507 = vadd.f32 %v475, 1e-06
        %v508 = vadd.f32 %v476, 1e-06
        %v509 = vadd.f32 %v477, 1e-06
        %v510 = vrsqrt.pop %v494
        %v511 = vrsqrt.pop %v495
        %v512 = vrsqrt.pop %v496
        %v513 = vrsqrt.pop %v497
        %v514 = vrsqrt.pop %v498
        %v515 = vrsqrt.pop %v499
        %v516 = vrsqrt.pop %v500
        %v517 = vrsqrt.pop %v501
        %v518 = vrsqrt.pop %v502
        %v519 = vrsqrt.pop %v503
        %v520 = vrsqrt.pop %v504
        %v521 = vrsqrt.pop %v505
        %v522 = vrsqrt.pop %v506
        %v523 = vrsqrt.pop %v507
        %v524 = vrsqrt.pop %v508
        %v525 = vrsqrt.pop %v509
        %v526 = vmul.f32 %v478, %v510
        %v527 = vmul.f32 %v479, %v511
        %v528 = vmul.f32 %v480, %v512
        %v529 = vmul.f32 %v481, %v513
        %v530 = vmul.f32 %v482, %v514
        %v531 = vmul.f32 %v483, %v515
        %v532 = vmul.f32 %v484, %v516
        %v533 = vmul.f32 %v485, %v517
        %v534 = vmul.f32 %v486, %v518
        %v535 = vmul.f32 %v487, %v519
        %v536 = vmul.f32 %v488, %v520
        %v537 = vmul.f32 %v489, %v521
        %v538 = vmul.f32 %v490, %v522
        %v539 = vmul.f32 %v491, %v523
        %v540 = vmul.f32 %v492, %v524
        %v541 = vmul.f32 %v493, %v525
        %v542 = vpack.c.bf16 %v527, %v526
        %v543 = vpack.c.bf16 %v529, %v528
        %v544 = vpack.c.bf16 %v531, %v530
        %v545 = vpack.c.bf16 %v533, %v532
        %v546 = vpack.c.bf16 %v535, %v534
        %v547 = vpack.c.bf16 %v537, %v536
        %v548 = vpack.c.bf16 %v539, %v538
        %v549 = vpack.c.bf16 %v541, %v540
        %v550 = vld [vmem:[%s272] sm:$0xff]
        %v551 = vld [vmem:[%s272 + $0x8] sm:$0xff]
        %v552 = vld [vmem:[%s272 + $0x10] sm:$0xff]
        %v553 = vld [vmem:[%s272 + $0x18] sm:$0xff]
        %v554 = vld [vmem:[%s272 + $0x20] sm:$0xff]
        %v555 = vld [vmem:[%s272 + $0x28] sm:$0xff]
        %v556 = vld [vmem:[%s272 + $0x30] sm:$0xff]
        %v557 = vld [vmem:[%s272 + $0x38] sm:$0xff]
        %v558 = vld [vmem:[%s272 + $0x40] sm:$0xff]
        %v559 = vld [vmem:[%s272 + $0x48] sm:$0xff]
        %v560 = vld [vmem:[%s272 + $0x50] sm:$0xff]
        %v561 = vld [vmem:[%s272 + $0x58] sm:$0xff]
        %v562 = vld [vmem:[%s272 + $0x60] sm:$0xff]
        %v563 = vld [vmem:[%s272 + $0x68] sm:$0xff]
        %v564 = vld [vmem:[%s272 + $0x70] sm:$0xff]
        %v565 = vld [vmem:[%s272 + $0x78] sm:$0xff]
        %566 = vadd.xlane.f32.xlu0 %v550
        %v567 = vpop.xlane.xlu0 %566
        %568 = vadd.xlane.f32.xlu0 %v551
        %v569 = vpop.xlane.xlu0 %568
        %570 = vadd.xlane.f32.xlu0 %v552
        %v571 = vpop.xlane.xlu0 %570
        %572 = vadd.xlane.f32.xlu0 %v553
        %v573 = vpop.xlane.xlu0 %572
        %574 = vadd.xlane.f32.xlu0 %v554
        %v575 = vpop.xlane.xlu0 %574
        %576 = vadd.xlane.f32.xlu0 %v555
        %v577 = vpop.xlane.xlu0 %576
        %578 = vadd.xlane.f32.xlu0 %v556
        %v579 = vpop.xlane.xlu0 %578
        %580 = vadd.xlane.f32.xlu0 %v557
        %v581 = vpop.xlane.xlu0 %580
        %582 = vadd.xlane.f32.xlu0 %v558
        %v583 = vpop.xlane.xlu0 %582
        %584 = vadd.xlane.f32.xlu0 %v559
        %v585 = vpop.xlane.xlu0 %584
        %586 = vadd.xlane.f32.xlu0 %v560
        %v587 = vpop.xlane.xlu0 %586
        %588 = vadd.xlane.f32.xlu0 %v561
        %v589 = vpop.xlane.xlu0 %588
        %590 = vadd.xlane.f32.xlu0 %v562
        %v591 = vpop.xlane.xlu0 %590
        %592 = vadd.xlane.f32.xlu0 %v563
        %v593 = vpop.xlane.xlu0 %592
        %594 = vadd.xlane.f32.xlu0 %v564
        %v595 = vpop.xlane.xlu0 %594
        %596 = vadd.xlane.f32.xlu0 %v565
        %v597 = vpop.xlane.xlu0 %596
        %v598 = vmul.f32 %v567, %v365
        %v599 = vmul.f32 %v569, %v365
        %v600 = vmul.f32 %v571, %v365
        %v601 = vmul.f32 %v573, %v365
        %v602 = vmul.f32 %v575, %v365
        %v603 = vmul.f32 %v577, %v365
        %v604 = vmul.f32 %v579, %v365
        %v605 = vmul.f32 %v581, %v365
        %v606 = vmul.f32 %v583, %v365
        %v607 = vmul.f32 %v585, %v365
        %v608 = vmul.f32 %v587, %v365
        %v609 = vmul.f32 %v589, %v365
        %v610 = vmul.f32 %v591, %v365
        %v611 = vmul.f32 %v593, %v365
        %v612 = vmul.f32 %v595, %v365
        %v613 = vmul.f32 %v597, %v365
        %v614 = vmul.f32 %v550, %v550
        %v615 = vmul.f32 %v551, %v551
        %v616 = vmul.f32 %v552, %v552
        %v617 = vmul.f32 %v553, %v553
        %v618 = vmul.f32 %v554, %v554
        %v619 = vmul.f32 %v555, %v555
        %v620 = vmul.f32 %v556, %v556
        %v621 = vmul.f32 %v557, %v557
        %v622 = vmul.f32 %v558, %v558
        %v623 = vmul.f32 %v559, %v559
        %v624 = vmul.f32 %v560, %v560
        %v625 = vmul.f32 %v561, %v561
        %v626 = vmul.f32 %v562, %v562
        %v627 = vmul.f32 %v563, %v563
        %v628 = vmul.f32 %v564, %v564
        %v629 = vmul.f32 %v565, %v565
        %630 = vadd.xlane.f32.xlu0 %v614
        %v631 = vpop.xlane.xlu0 %630
        %632 = vadd.xlane.f32.xlu0 %v615
        %v633 = vpop.xlane.xlu0 %632
        %634 = vadd.xlane.f32.xlu0 %v616
        %v635 = vpop.xlane.xlu0 %634
        %636 = vadd.xlane.f32.xlu0 %v617
        %v637 = vpop.xlane.xlu0 %636
        %638 = vadd.xlane.f32.xlu0 %v618
        %v639 = vpop.xlane.xlu0 %638
        %640 = vadd.xlane.f32.xlu0 %v619
        %v641 = vpop.xlane.xlu0 %640
        %642 = vadd.xlane.f32.xlu0 %v620
        %v643 = vpop.xlane.xlu0 %642
        %644 = vadd.xlane.f32.xlu0 %v621
        %v645 = vpop.xlane.xlu0 %644
        %646 = vadd.xlane.f32.xlu0 %v622
        %v647 = vpop.xlane.xlu0 %646
        %648 = vadd.xlane.f32.xlu0 %v623
        %v649 = vpop.xlane.xlu0 %648
        %650 = vadd.xlane.f32.xlu0 %v624
        %v651 = vpop.xlane.xlu0 %650
        %652 = vadd.xlane.f32.xlu0 %v625
        %v653 = vpop.xlane.xlu0 %652
        %654 = vadd.xlane.f32.xlu0 %v626
        %v655 = vpop.xlane.xlu0 %654
        %656 = vadd.xlane.f32.xlu0 %v627
        %v657 = vpop.xlane.xlu0 %656
        %658 = vadd.xlane.f32.xlu0 %v628
        %v659 = vpop.xlane.xlu0 %658
        %660 = vadd.xlane.f32.xlu0 %v629
        %v661 = vpop.xlane.xlu0 %660
        %v662 = vmul.f32 %v631, %v365
        %v663 = vmul.f32 %v633, %v365
        %v664 = vmul.f32 %v635, %v365
        %v665 = vmul.f32 %v637, %v365
        %v666 = vmul.f32 %v639, %v365
        %v667 = vmul.f32 %v641, %v365
        %v668 = vmul.f32 %v643, %v365
        %v669 = vmul.f32 %v645, %v365
        %v670 = vmul.f32 %v647, %v365
        %v671 = vmul.f32 %v649, %v365
        %v672 = vmul.f32 %v651, %v365
        %v673 = vmul.f32 %v653, %v365
        %v674 = vmul.f32 %v655, %v365
        %v675 = vmul.f32 %v657, %v365
        %v676 = vmul.f32 %v659, %v365
        %v677 = vmul.f32 %v661, %v365
        %v678 = vmul.f32 %v598, %v598
        %v679 = vmul.f32 %v599, %v599
        %v680 = vmul.f32 %v600, %v600
        %v681 = vmul.f32 %v601, %v601
        %v682 = vmul.f32 %v602, %v602
        %v683 = vmul.f32 %v603, %v603
        %v684 = vmul.f32 %v604, %v604
        %v685 = vmul.f32 %v605, %v605
        %v686 = vmul.f32 %v606, %v606
        %v687 = vmul.f32 %v607, %v607
        %v688 = vmul.f32 %v608, %v608
        %v689 = vmul.f32 %v609, %v609
        %v690 = vmul.f32 %v610, %v610
        %v691 = vmul.f32 %v611, %v611
        %v692 = vmul.f32 %v612, %v612
        %v693 = vmul.f32 %v613, %v613
        %v694 = vsub.f32 %v662, %v678
        %v695 = vsub.f32 %v663, %v679
        %v696 = vsub.f32 %v664, %v680
        %v697 = vsub.f32 %v665, %v681
        %v698 = vsub.f32 %v666, %v682
        %v699 = vsub.f32 %v667, %v683
        %v700 = vsub.f32 %v668, %v684
        %v701 = vsub.f32 %v669, %v685
        %v702 = vsub.f32 %v670, %v686
        %v703 = vsub.f32 %v671, %v687
        %v704 = vsub.f32 %v672, %v688
        %v705 = vsub.f32 %v673, %v689
        %v706 = vsub.f32 %v674, %v690
        %v707 = vsub.f32 %v675, %v691
        %v708 = vsub.f32 %v676, %v692
        %v709 = vsub.f32 %v677, %v693
        %v710 = vsub.f32 %v550, %v598
        %v711 = vsub.f32 %v551, %v599
        %v712 = vsub.f32 %v552, %v600
        %v713 = vsub.f32 %v553, %v601
        %v714 = vsub.f32 %v554, %v602
        %v715 = vsub.f32 %v555, %v603
        %v716 = vsub.f32 %v556, %v604
        %v717 = vsub.f32 %v557, %v605
        %v718 = vsub.f32 %v558, %v606
        %v719 = vsub.f32 %v559, %v607
        %v720 = vsub.f32 %v560, %v608
        %v721 = vsub.f32 %v561, %v609
        %v722 = vsub.f32 %v562, %v610
        %v723 = vsub.f32 %v563, %v611
        %v724 = vsub.f32 %v564, %v612
        %v725 = vsub.f32 %v565, %v613
        %v726 = vadd.f32 %v694, 1e-06
        %v727 = vadd.f32 %v695, 1e-06
        %v728 = vadd.f32 %v696, 1e-06
        %v729 = vadd.f32 %v697, 1e-06
        %v730 = vadd.f32 %v698, 1e-06
        %v731 = vadd.f32 %v699, 1e-06
        %v732 = vadd.f32 %v700, 1e-06
        %v733 = vadd.f32 %v701, 1e-06
        %v734 = vadd.f32 %v702, 1e-06
        %v735 = vadd.f32 %v703, 1e-06
        %v736 = vadd.f32 %v704, 1e-06
        %v737 = vadd.f32 %v705, 1e-06
        %v738 = vadd.f32 %v706, 1e-06
        %v739 = vadd.f32 %v707, 1e-06
        %v740 = vadd.f32 %v708, 1e-06
        %v741 = vadd.f32 %v709, 1e-06
        %v742 = vrsqrt.pop %v726
        %v743 = vrsqrt.pop %v727
        %v744 = vrsqrt.pop %v728
        %v745 = vrsqrt.pop %v729
        %v746 = vrsqrt.pop %v730
        %v747 = vrsqrt.pop %v731
        %v748 = vrsqrt.pop %v732
        %v749 = vrsqrt.pop %v733
        %v750 = vrsqrt.pop %v734
        %v751 = vrsqrt.pop %v735
        %v752 = vrsqrt.pop %v736
        %v753 = vrsqrt.pop %v737
        %v754 = vrsqrt.pop %v738
        %v755 = vrsqrt.pop %v739
        %v756 = vrsqrt.pop %v740
        %v757 = vrsqrt.pop %v741
        %v758 = vmul.f32 %v710, %v742
        %v759 = vmul.f32 %v711, %v743
        %v760 = vmul.f32 %v712, %v744
        %v761 = vmul.f32 %v713, %v745
        %v762 = vmul.f32 %v714, %v746
        %v763 = vmul.f32 %v715, %v747
        %v764 = vmul.f32 %v716, %v748
        %v765 = vmul.f32 %v717, %v749
        %v766 = vmul.f32 %v718, %v750
        %v767 = vmul.f32 %v719, %v751
        %v768 = vmul.f32 %v720, %v752
        %v769 = vmul.f32 %v721, %v753
        %v770 = vmul.f32 %v722, %v754
        %v771 = vmul.f32 %v723, %v755
        %v772 = vmul.f32 %v724, %v756
        %v773 = vmul.f32 %v725, %v757
        %v774 = vpack.c.bf16 %v759, %v758
        %v775 = vpack.c.bf16 %v761, %v760
        %v776 = vpack.c.bf16 %v763, %v762
        %v777 = vpack.c.bf16 %v765, %v764
        %v778 = vpack.c.bf16 %v767, %v766
        %v779 = vpack.c.bf16 %v769, %v768
        %v780 = vpack.c.bf16 %v771, %v770
        %v781 = vpack.c.bf16 %v773, %v772
        %v782 = vld [vmem:[#allocation7] sm:$0xf]
        %v783 = vld [vmem:[#allocation7 + $0x4] sm:$0xf]
        %v784 = vld [vmem:[#allocation7 + $0x8] sm:$0xf]
        %v785 = vld [vmem:[#allocation7 + $0xc] sm:$0xf]
        %v786 = vld [vmem:[#allocation7 + $0x10] sm:$0xf]
        %v787 = vld [vmem:[#allocation7 + $0x14] sm:$0xf]
        %v788 = vld [vmem:[#allocation7 + $0x18] sm:$0xf]
        %v789 = vld [vmem:[#allocation7 + $0x1c] sm:$0xf]
        %v790 = vld [vmem:[#allocation7 + $0x20] sm:$0xf]
        %v791 = vld [vmem:[#allocation7 + $0x24] sm:$0xf]
        %v792 = vld [vmem:[#allocation7 + $0x28] sm:$0xf]
        %v793 = vld [vmem:[#allocation7 + $0x2c] sm:$0xf]
        %v794 = vld [vmem:[#allocation7 + $0x30] sm:$0xf]
        %v795 = vld [vmem:[#allocation7 + $0x34] sm:$0xf]
        %v796 = vld [vmem:[#allocation7 + $0x38] sm:$0xf]
        %v797 = vld [vmem:[#allocation7 + $0x3c] sm:$0xf]
        %v798 = vld [vmem:[#allocation8] sm:$0xf]
        %v799 = vld [vmem:[#allocation8 + $0x4] sm:$0xf]
        %v800 = vld [vmem:[#allocation8 + $0x8] sm:$0xf]
        %v801 = vld [vmem:[#allocation8 + $0xc] sm:$0xf]
        %v802 = vld [vmem:[#allocation8 + $0x10] sm:$0xf]
        %v803 = vld [vmem:[#allocation8 + $0x14] sm:$0xf]
        %v804 = vld [vmem:[#allocation8 + $0x18] sm:$0xf]
        %v805 = vld [vmem:[#allocation8 + $0x1c] sm:$0xf]
        %v806 = vld [vmem:[#allocation8 + $0x20] sm:$0xf]
        %v807 = vld [vmem:[#allocation8 + $0x24] sm:$0xf]
        %v808 = vld [vmem:[#allocation8 + $0x28] sm:$0xf]
        %v809 = vld [vmem:[#allocation8 + $0x2c] sm:$0xf]
        %v810 = vld [vmem:[#allocation8 + $0x30] sm:$0xf]
        %v811 = vld [vmem:[#allocation8 + $0x34] sm:$0xf]
        %v812 = vld [vmem:[#allocation8 + $0x38] sm:$0xf]
        %v813 = vld [vmem:[#allocation8 + $0x3c] sm:$0xf]
        %v830 = vunpack.c.l.b16 %v798
        %v831 = vunpack.c.l.b16 %v799
        %v832 = vunpack.c.l.b16 %v800
        %v833 = vunpack.c.l.b16 %v801
        %v834 = vunpack.c.l.b16 %v802
        %v835 = vunpack.c.l.b16 %v803
        %v836 = vunpack.c.l.b16 %v804
        %v837 = vunpack.c.l.b16 %v805
        %v838 = vunpack.c.l.b16 %v806
        %v839 = vunpack.c.l.b16 %v807
        %v840 = vunpack.c.l.b16 %v808
        %v841 = vunpack.c.l.b16 %v809
        %v842 = vunpack.c.l.b16 %v810
        %v843 = vunpack.c.l.b16 %v811
        %v844 = vunpack.c.l.b16 %v812
        %v845 = vunpack.c.l.b16 %v813
        %v846 = vpack.c.b16 %v831, %v830
        %v847 = vpack.c.b16 %v833, %v832
        %v848 = vpack.c.b16 %v835, %v834
        %v849 = vpack.c.b16 %v837, %v836
        %v850 = vpack.c.b16 %v839, %v838
        %v851 = vpack.c.b16 %v841, %v840
        %v852 = vpack.c.b16 %v843, %v842
        %v853 = vpack.c.b16 %v845, %v844
        %862 = vmatprep.subr.bf16.mxu0 0
        %863 = vmatpush1.bf16.msra.mxu0 %v846
        %864 = vmatprep.subr.bf16.mxu0 0
        %865 = vmatpush1.bf16.msra.mxu0 %v847
        %866 = vmatprep.subr.bf16.mxu0 0
        %867 = vmatpush1.bf16.msra.mxu0 %v848
        %868 = vmatprep.subr.bf16.mxu0 0
        %869 = vmatpush1.bf16.msra.mxu0 %v849
        %870 = vmatprep.subr.bf16.mxu0 0
        %871 = vmatpush1.bf16.msra.mxu0 %v850
        %872 = vmatprep.subr.bf16.mxu0 0
        %873 = vmatpush1.bf16.msra.mxu0 %v851
        %874 = vmatprep.subr.bf16.mxu0 0
        %875 = vmatpush1.bf16.msra.mxu0 %v852
        %876 = vmatprep.subr.bf16.mxu0 0
        %877 = vmatpush1.bf16.msra.mxu0 %v853
        %878 = vmatprep.subr.bf16.mxu0 0
        %879 = vmatpush1.bf16.msra.mxu0 0
        %880 = vmatprep.subr.bf16.mxu0 0
        %881 = vmatpush1.bf16.msra.mxu0 0
        %882 = vmatprep.subr.bf16.mxu0 0
        %883 = vmatpush1.bf16.msra.mxu0 0
        %884 = vmatprep.subr.bf16.mxu0 0
        %885 = vmatpush1.bf16.msra.mxu0 0
        %886 = vmatprep.subr.bf16.mxu0 0
        %887 = vmatpush1.bf16.msra.mxu0 0
        %888 = vmatprep.subr.bf16.mxu0 0
        %889 = vmatpush1.bf16.msra.mxu0 0
        %890 = vmatprep.subr.bf16.mxu0 0
        %891 = vmatpush1.bf16.msra.mxu0 0
        %892 = vmatprep.subr.bf16.mxu0 0
        %893 = vmatpush1.bf16.msra.mxu0 0
        %894 = vmatprep.mubr.bf16.mxu0 0
        %895 = vmatmul.mubr.bf16.gmra.mrb[0].mxu0 %v774
        %v896 = vpop.f32.mrb[0].mxu0
        %v897 = vadd.f32 0.0, %v896
        %v898 = vpop.f32.mrb[0].mxu0
        %v899 = vpop.f32.mrb[0].mxu0
        %v900 = vadd.f32 0.0, %v899
        %v901 = vpop.f32.mrb[0].mxu0
        %902 = vmatprep.mubr.bf16.mxu0 0
        %903 = vmatmul.mubr.bf16.gmra.mrb[0].mxu0 %v775
        %v904 = vpop.f32.mrb[0].mxu0
        %v905 = vadd.f32 0.0, %v904
        %v906 = vpop.f32.mrb[0].mxu0
        %v907 = vpop.f32.mrb[0].mxu0
        %v908 = vadd.f32 0.0, %v907
        %v909 = vpop.f32.mrb[0].mxu0
        %910 = vmatprep.mubr.bf16.mxu0 0
        %911 = vmatmul.mubr.bf16.gmra.mrb[0].mxu0 %v776
        %v912 = vpop.f32.mrb[0].mxu0
        %v913 = vadd.f32 0.0, %v912
        %v914 = vpop.f32.mrb[0].mxu0
        %v915 = vpop.f32.mrb[0].mxu0
        %v916 = vadd.f32 0.0, %v915
        %v917 = vpop.f32.mrb[0].mxu0
        %918 = vmatprep.mubr.bf16.mxu0 0
        %919 = vmatmul.mubr.bf16.gmra.mrb[0].mxu0 %v777
        %v920 = vpop.f32.mrb[0].mxu0
        %v921 = vadd.f32 0.0, %v920
        %v922 = vpop.f32.mrb[0].mxu0
        %v923 = vpop.f32.mrb[0].mxu0
        %v924 = vadd.f32 0.0, %v923
        %v925 = vpop.f32.mrb[0].mxu0
        %926 = vmatprep.mubr.bf16.mxu0 0
        %927 = vmatmul.mubr.bf16.gmra.mrb[0].mxu0 %v778
        %v928 = vpop.f32.mrb[0].mxu0
        %v929 = vadd.f32 0.0, %v928
        %v930 = vpop.f32.mrb[0].mxu0
        %v931 = vpop.f32.mrb[0].mxu0
        %v932 = vadd.f32 0.0, %v931
        %v933 = vpop.f32.mrb[0].mxu0
        %934 = vmatprep.mubr.bf16.mxu0 0
        %935 = vmatmul.mubr.bf16.gmra.mrb[0].mxu0 %v779
        %v936 = vpop.f32.mrb[0].mxu0
        %v937 = vadd.f32 0.0, %v936
        %v938 = vpop.f32.mrb[0].mxu0
        %v939 = vpop.f32.mrb[0].mxu0
        %v940 = vadd.f32 0.0, %v939
        %v941 = vpop.f32.mrb[0].mxu0
        %942 = vmatprep.mubr.bf16.mxu0 0
        %943 = vmatmul.mubr.bf16.gmra.mrb[0].mxu0 %v780
        %v944 = vpop.f32.mrb[0].mxu0
        %v945 = vadd.f32 0.0, %v944
        %v946 = vpop.f32.mrb[0].mxu0
        %v947 = vpop.f32.mrb[0].mxu0
        %v948 = vadd.f32 0.0, %v947
        %v949 = vpop.f32.mrb[0].mxu0
        %950 = vmatprep.mubr.bf16.mxu0 0
        %951 = vmatmul.mubr.bf16.gmra.mrb[0].mxu0 %v781
        %v952 = vpop.f32.mrb[0].mxu0
        %v953 = vadd.f32 0.0, %v952
        %v954 = vpop.f32.mrb[0].mxu0
        %v955 = vpop.f32.mrb[0].mxu0
        %v956 = vadd.f32 0.0, %v955
        %v957 = vpop.f32.mrb[0].mxu0
        %958 = vdwg.mxu0
        %v975 = vunpack.c.l.b16 %v782
        %v976 = vunpack.c.l.b16 %v783
        %v977 = vunpack.c.l.b16 %v784
        %v978 = vunpack.c.l.b16 %v785
        %v979 = vunpack.c.l.b16 %v786
        %v980 = vunpack.c.l.b16 %v787
        %v981 = vunpack.c.l.b16 %v788
        %v982 = vunpack.c.l.b16 %v789
        %v983 = vunpack.c.l.b16 %v790
        %v984 = vunpack.c.l.b16 %v791
        %v985 = vunpack.c.l.b16 %v792
        %v986 = vunpack.c.l.b16 %v793
        %v987 = vunpack.c.l.b16 %v794
        %v988 = vunpack.c.l.b16 %v795
        %v989 = vunpack.c.l.b16 %v796
        %v990 = vunpack.c.l.b16 %v797
        %v991 = vpack.c.b16 %v976, %v975
        %v992 = vpack.c.b16 %v978, %v977
        %v993 = vpack.c.b16 %v980, %v979
        %v994 = vpack.c.b16 %v982, %v981
        %v995 = vpack.c.b16 %v984, %v983
        %v996 = vpack.c.b16 %v986, %v985
        %v997 = vpack.c.b16 %v988, %v987
        %v998 = vpack.c.b16 %v990, %v989
        %1007 = vmatprep.subr.bf16.mxu0 0
        %1008 = vmatpush1.bf16.msra.mxu0 %v991
        %1009 = vmatprep.subr.bf16.mxu0 0
        %1010 = vmatpush1.bf16.msra.mxu0 %v992
        %1011 = vmatprep.subr.bf16.mxu0 0
        %1012 = vmatpush1.bf16.msra.mxu0 %v993
        %1013 = vmatprep.subr.bf16.mxu0 0
        %1014 = vmatpush1.bf16.msra.mxu0 %v994
        %1015 = vmatprep.subr.bf16.mxu0 0
        %1016 = vmatpush1.bf16.msra.mxu0 %v995
        %1017 = vmatprep.subr.bf16.mxu0 0
        %1018 = vmatpush1.bf16.msra.mxu0 %v996
        %1019 = vmatprep.subr.bf16.mxu0 0
        %1020 = vmatpush1.bf16.msra.mxu0 %v997
        %1021 = vmatprep.subr.bf16.mxu0 0
        %1022 = vmatpush1.bf16.msra.mxu0 %v998
        %1023 = vmatprep.subr.bf16.mxu0 0
        %1024 = vmatpush1.bf16.msra.mxu0 0
        %1025 = vmatprep.subr.bf16.mxu0 0
        %1026 = vmatpush1.bf16.msra.mxu0 0
        %1027 = vmatprep.subr.bf16.mxu0 0
        %1028 = vmatpush1.bf16.msra.mxu0 0
        %1029 = vmatprep.subr.bf16.mxu0 0
        %1030 = vmatpush1.bf16.msra.mxu0 0
        %1031 = vmatprep.subr.bf16.mxu0 0
        %1032 = vmatpush1.bf16.msra.mxu0 0
        %1033 = vmatprep.subr.bf16.mxu0 0
        %1034 = vmatpush1.bf16.msra.mxu0 0
        %1035 = vmatprep.subr.bf16.mxu0 0
        %1036 = vmatpush1.bf16.msra.mxu0 0
        %1037 = vmatprep.subr.bf16.mxu0 0
        %1038 = vmatpush1.bf16.msra.mxu0 0
        %1039 = vmatprep.mubr.bf16.mxu0 0
        %1040 = vmatmul.mubr.bf16.gmra.mrb[0].mxu0 %v542
        %v1041 = vpop.f32.mrb[0].mxu0
        %v1042 = vadd.f32 %v897, %v1041
        %v1043 = vpop.f32.mrb[0].mxu0
        %v1044 = vpop.f32.mrb[0].mxu0
        %v1045 = vadd.f32 %v900, %v1044
        %v1046 = vpop.f32.mrb[0].mxu0
        %1047 = vmatprep.mubr.bf16.mxu0 0
        %1048 = vmatmul.mubr.bf16.gmra.mrb[0].mxu0 %v543
        %v1049 = vpop.f32.mrb[0].mxu0
        %v1050 = vadd.f32 %v905, %v1049
        %v1051 = vpop.f32.mrb[0].mxu0
        %v1052 = vpop.f32.mrb[0].mxu0
        %v1053 = vadd.f32 %v908, %v1052
        %v1054 = vpop.f32.mrb[0].mxu0
        %1055 = vmatprep.mubr.bf16.mxu0 0
        %1056 = vmatmul.mubr.bf16.gmra.mrb[0].mxu0 %v544
        %v1057 = vpop.f32.mrb[0].mxu0
        %v1058 = vadd.f32 %v913, %v1057
        %v1059 = vpop.f32.mrb[0].mxu0
        %v1060 = vpop.f32.mrb[0].mxu0
        %v1061 = vadd.f32 %v916, %v1060
        %v1062 = vpop.f32.mrb[0].mxu0
        %1063 = vmatprep.mubr.bf16.mxu0 0
        %1064 = vmatmul.mubr.bf16.gmra.mrb[0].mxu0 %v545
        %v1065 = vpop.f32.mrb[0].mxu0
        %v1066 = vadd.f32 %v921, %v1065
        %v1067 = vpop.f32.mrb[0].mxu0
        %v1068 = vpop.f32.mrb[0].mxu0
        %v1069 = vadd.f32 %v924, %v1068
        %v1070 = vpop.f32.mrb[0].mxu0
        %1071 = vmatprep.mubr.bf16.mxu0 0
        %1072 = vmatmul.mubr.bf16.gmra.mrb[0].mxu0 %v546
        %v1073 = vpop.f32.mrb[0].mxu0
        %v1074 = vadd.f32 %v929, %v1073
        %v1075 = vpop.f32.mrb[0].mxu0
        %v1076 = vpop.f32.mrb[0].mxu0
        %v1077 = vadd.f32 %v932, %v1076
        %v1078 = vpop.f32.mrb[0].mxu0
        %1079 = vmatprep.mubr.bf16.mxu0 0
        %1080 = vmatmul.mubr.bf16.gmra.mrb[0].mxu0 %v547
        %v1081 = vpop.f32.mrb[0].mxu0
        %v1082 = vadd.f32 %v937, %v1081
        %v1083 = vpop.f32.mrb[0].mxu0
        %v1084 = vpop.f32.mrb[0].mxu0
        %v1085 = vadd.f32 %v940, %v1084
        %v1086 = vpop.f32.mrb[0].mxu0
        %1087 = vmatprep.mubr.bf16.mxu0 0
        %1088 = vmatmul.mubr.bf16.gmra.mrb[0].mxu0 %v548
        %v1089 = vpop.f32.mrb[0].mxu0
        %v1090 = vadd.f32 %v945, %v1089
        %v1091 = vpop.f32.mrb[0].mxu0
        %v1092 = vpop.f32.mrb[0].mxu0
        %v1093 = vadd.f32 %v948, %v1092
        %v1094 = vpop.f32.mrb[0].mxu0
        %1095 = vmatprep.mubr.bf16.mxu0 0
        %1096 = vmatmul.mubr.bf16.gmra.mrb[0].mxu0 %v549
        %v1097 = vpop.f32.mrb[0].mxu0
        %v1098 = vadd.f32 %v953, %v1097
        %v1099 = vpop.f32.mrb[0].mxu0
        %v1100 = vpop.f32.mrb[0].mxu0
        %v1101 = vadd.f32 %v956, %v1100
        %v1102 = vpop.f32.mrb[0].mxu0
        %1103 = vdwg.mxu0
        %v1105 = vlaneseq
        %v1106 = vshrl.u32 %v1105, 7
        %v1107 = vsub.s32 0, %v1106
        %v1108 = vrot.slane %v316, %v1107
        %v1110 = vadd.f32 %v1042, %v1108
        %v1111 = vadd.f32 %v1045, %v1108
        %v1112 = vadd.f32 %v1050, %v1108
        %v1113 = vadd.f32 %v1053, %v1108
        %v1114 = vadd.f32 %v1058, %v1108
        %v1115 = vadd.f32 %v1061, %v1108
        %v1116 = vadd.f32 %v1066, %v1108
        %v1117 = vadd.f32 %v1069, %v1108
        %v1118 = vadd.f32 %v1074, %v1108
        %v1119 = vadd.f32 %v1077, %v1108
        %v1120 = vadd.f32 %v1082, %v1108
        %v1121 = vadd.f32 %v1085, %v1108
        %v1122 = vadd.f32 %v1090, %v1108
        %v1123 = vadd.f32 %v1093, %v1108
        %v1124 = vadd.f32 %v1098, %v1108
        %v1125 = vadd.f32 %v1101, %v1108
        %1126 = vst [vmem:[%s311] sm:$0xff] %v1110
        %1127 = vst [vmem:[%s311 + $0x8] sm:$0xff] %v1111
        %1128 = vst [vmem:[%s311 + $0x10] sm:$0xff] %v1112
        %1129 = vst [vmem:[%s311 + $0x18] sm:$0xff] %v1113
        %1130 = vst [vmem:[%s311 + $0x20] sm:$0xff] %v1114
        %1131 = vst [vmem:[%s311 + $0x28] sm:$0xff] %v1115
        %1132 = vst [vmem:[%s311 + $0x30] sm:$0xff] %v1116
        %1133 = vst [vmem:[%s311 + $0x38] sm:$0xff] %v1117
        %1134 = vst [vmem:[%s311 + $0x40] sm:$0xff] %v1118
        %1135 = vst [vmem:[%s311 + $0x48] sm:$0xff] %v1119
        %1136 = vst [vmem:[%s311 + $0x50] sm:$0xff] %v1120
        %1137 = vst [vmem:[%s311 + $0x58] sm:$0xff] %v1121
        %1138 = vst [vmem:[%s311 + $0x60] sm:$0xff] %v1122
        %1139 = vst [vmem:[%s311 + $0x68] sm:$0xff] %v1123
        %1140 = vst [vmem:[%s311 + $0x70] sm:$0xff] %v1124
        %1141 = vst [vmem:[%s311 + $0x78] sm:$0xff] %v1125
        %s1142 = sand.u32 %s149, 1
        %s1143 = scalar_lea.sflag [#allocation4], %s1142
        %s1144 = sand.u32 %s149, 1
        %s1145 = smul.addr %s1144, 128
        %s1146 = scalar_lea.vmem [#allocation10], %s1145
        // Predicated region
        $region57: #{tpu_custom_call.1} parent=39 // pred_check
          %p1147 = pneg %p159
        $region58: #{tpu_custom_call.1} parent=39 // pred_check_branch
          %1149 = sbr.rel (%p1147) target = $region60
        $region59: #{tpu_custom_call.1} parent=39 // pred_region
          %s1150 = smul.u32 16, %s26
          %s1152 = ssub.s32 2048, 2048
          %1153 = vsyncadd %s1143, %s1152
          %s1154 = smul.addr %s1150, 128
          %s1155 = scalar_lea.hbm %s5, %s1154
          %s1156 = sshll.u32 %s1146, 4
          %s1157 = int_to_ptr.vmem [resolvable:$true] %s1156
          %1162 = dma.vmem_to_hbm [thread:$0]  %s1157, 2048, %s1155, %s1143, 128, 128, 8
        $region60: #{tpu_custom_call.1} parent=39 // pred_fallthru
          _
      $region40: #{tpu_custom_call.1} parent=5 // pred_fallthru
        _
      %p1163 = scmp.le.s32.totalorder 2, %s21
      // Predicated region
      $region61: #{tpu_custom_call.1} parent=5 // pred_check
        %p1164 = pneg %p1163
      $region62: #{tpu_custom_call.1} parent=5 // pred_check_branch
        %1166 = sbr.rel (%p1164) target = $region64
      $region63: #{tpu_custom_call.1} parent=5 // pred_region
        %s1167 = ssub.s32 %s21, 2
        // Predicated region
        $region65: #{tpu_custom_call.1} parent=63 // pred_check
          %p1168 = pneg %p165
        $region66: #{tpu_custom_call.1} parent=63 // pred_check_branch
          %1170 = sbr.rel (%p1168) target = $region68
        $region67: #{tpu_custom_call.1} parent=63 // pred_region
          %s1171 = sand.u32 %s150, 1
          %s1172 = scalar_lea.sflag [#allocation4], %s1171
          %s1173 = sand.u32 %s150, 1
          %s1174 = smul.addr %s1173, 128
          %s1175 = scalar_lea.vmem [#allocation10], %s1174
          %1176 = dma.done %s1172, 2048
        $region68: #{tpu_custom_call.1} parent=63 // pred_fallthru
          _
      $region64: #{tpu_custom_call.1} parent=5 // pred_fallthru
        _
    $region6: #{tpu_custom_call.1} parent=1 // loop_footer
      %s25 = sadd.s32 1, %s21
    $region7: #{tpu_custom_call.1} parent=1 // loop_footer_branch
      %20 = sbr.rel target = $region3
    $region8: #{tpu_custom_call.1} parent=1 // loop_exit
      _
    %1177 = vsyncpa [#allocation3], 1
    %s1178 = scalar_lea.sflag [#allocation3], 1
    %1179 = vsyncpa %s1178, 1
    %1180 = vsyncpa [#allocation6], 1
    %s1181 = scalar_lea.sflag [#allocation6], 1
    %1182 = vsyncpa %s1181, 1
    %1183 = vsyncpa [#allocation9], 1
    %1184 = vsyncpa [#allocation4], 1
    %s1185 = scalar_lea.sflag [#allocation4], 1
    %1186 = vsyncpa %s1185, 1

</llo_original>
